<compile_context>
chip_gen: v5e
topology: v5e:2x2
jax: 0.10.0
libtpu: 0.0.40
codegen_flags: <defaults>
</compile_context>

<pallas_src>
import jax
import jax.numpy as jnp
from jax.experimental import pallas as pl
from jax.experimental.pallas import tpu as pltpu


def pos_enc_kernel(x_ref, pos_ref, mean_ref, std_ref, out_ref):
    # x_ref:   (B, L)  with L = S*D, lane-dense (L is a multiple of 128 at test size)
    # pos_ref: (1, L)  positional-encoding rows for the first S positions, flattened
    # mean_ref/std_ref: (1, L)  per-embed-dim statistics tiled across the S positions
    pos_n = (pos_ref[...] - mean_ref[...]) / std_ref[...]   # (1, L)
    out_ref[...] = x_ref[...] + pos_n                       # broadcast over the B rows


def data_aware_positional_encoding(x, positional_encoding, mean, std):
    """Forward pass of DataAwareLearnablePositionalEncoding.

    x:                     (B, S, D) float32
    positional_encoding:   (1, max_len, D) float32 learnable parameter
    mean, std:             (D,) float32 (scalar data stats expanded to embed_dim)
    """
    B, S, D = x.shape
    L = S * D

    # ---- wrapper-side layout plumbing (no compute hoisted out of the kernel) ----
    x2 = x.reshape(B, L)
    pos2 = positional_encoding[:, :S, :].reshape(1, L)       # slice to seq length, flatten
    mean2 = jnp.tile(mean.reshape(1, D), (1, S))             # (1, L): index s*D+d -> mean[d]
    std2 = jnp.tile(std.reshape(1, D), (1, S))               # (1, L): index s*D+d -> std[d]

    out2 = pl.pallas_call(
        pos_enc_kernel,
        out_shape=jax.ShapeDtypeStruct((B, L), x.dtype),
        grid=(1,),                                            # single step: whole problem in VMEM
        in_specs=[
            pl.BlockSpec((B, L), lambda i: (0, 0)),           # x (flattened, lane-dense)
            pl.BlockSpec((1, L), lambda i: (0, 0)),           # positional encoding slice
            pl.BlockSpec((1, L), lambda i: (0, 0)),           # mean (tiled over S)
            pl.BlockSpec((1, L), lambda i: (0, 0)),           # std  (tiled over S)
        ],
        out_specs=pl.BlockSpec((B, L), lambda i: (0, 0)),
        compiler_params=pltpu.CompilerParams(
            dimension_semantics=("arbitrary",)),
    )(x2, pos2, mean2, std2)

    return out2.reshape(B, S, D)


# ---------------- pure-JAX reference for sanity check ----------------
def reference(x, positional_encoding, mean, std):
    S = x.shape[1]
    pe = (positional_encoding[:, :S, :] - mean) / std
    return x + pe


if __name__ == "__main__":
    B, S, D = 2, 8, 32
    max_len = 500
    init_std = 1e-6

    key = jax.random.PRNGKey(0)
    k_x, k_m, k_s, k_pe = jax.random.split(key, 4)

    x = jax.random.normal(k_x, (B, S, D), jnp.float32)

    # "data statistics" handed to the module __init__ (arbitrary tensors)
    data_mean = 1.0 + 2.0 * jax.random.normal(k_m, (D,), jnp.float32)
    data_std = 0.5 + jnp.abs(jax.random.normal(k_s, (D,), jnp.float32))

    # __init__: mean = mean.mean().expand(embed_dim); std = std.mean().expand(embed_dim)
    mean_vec = jnp.full((D,), data_mean.mean(), jnp.float32)
    std_vec = jnp.full((D,), data_std.mean(), jnp.float32)

    # positional_encoding parameter: nn.init.normal_(zeros(1, max_len, D),
    #                                                mean=mean.mean(), std=init_std)
    pos_param = data_mean.mean() + init_std * jax.random.normal(
        k_pe, (1, max_len, D), jnp.float32)

    out = data_aware_positional_encoding(x, pos_param, mean_vec, std_vec)
    out = jax.block_until_ready(out)

    ref = jax.block_until_ready(reference(x, pos_param, mean_vec, std_vec))
    assert out.shape == (B, S, D)
    assert jnp.allclose(out, ref, atol=1e-5, rtol=1e-5), "mismatch vs reference"

    print("KERNEL_OK")
</pallas_src>

<mosaic_0001>
module attributes {stable_mosaic.version = 11 : i64} {
  func.func @pos_enc_kernel(%arg0: i32, %arg1: memref<2x256xf32, #tpu.memory_space<vmem>>, %arg2: memref<1x256xf32, #tpu.memory_space<vmem>>, %arg3: memref<1x256xf32, #tpu.memory_space<vmem>>, %arg4: memref<1x256xf32, #tpu.memory_space<vmem>>, %arg5: memref<2x256xf32, #tpu.memory_space<vmem>>) attributes {dimension_semantics = [#tpu.dimension_semantics<arbitrary>], iteration_bounds = array<i64: 1>, scalar_prefetch = 0 : i64, scratch_operands = 0 : i64, tpu.core_type = #tpu.core_type<tc>, window_params = [{pipeline_mode = #tpu.pipeline_mode<synchronous>, transform_indices = @transform_0, window_bounds = array<i64: 2, 256>}, {pipeline_mode = #tpu.pipeline_mode<synchronous>, transform_indices = @transform_1, window_bounds = array<i64: 1, 256>}, {pipeline_mode = #tpu.pipeline_mode<synchronous>, transform_indices = @transform_2, window_bounds = array<i64: 1, 256>}, {pipeline_mode = #tpu.pipeline_mode<synchronous>, transform_indices = @transform_3, window_bounds = array<i64: 1, 256>}, {pipeline_mode = #tpu.pipeline_mode<synchronous>, transform_indices = @transform_4, window_bounds = array<i64: 2, 256>}]} {
    %c0 = arith.constant 0 : index
    %c0_0 = arith.constant 0 : index
    %0 = vector.load %arg2[%c0, %c0_0] : memref<1x256xf32, #tpu.memory_space<vmem>>, vector<1x256xf32>
    %c0_1 = arith.constant 0 : index
    %c0_2 = arith.constant 0 : index
    %1 = vector.load %arg3[%c0_1, %c0_2] : memref<1x256xf32, #tpu.memory_space<vmem>>, vector<1x256xf32>
    %2 = arith.subf %0, %1 : vector<1x256xf32>
    %c0_3 = arith.constant 0 : index
    %c0_4 = arith.constant 0 : index
    %3 = vector.load %arg4[%c0_3, %c0_4] : memref<1x256xf32, #tpu.memory_space<vmem>>, vector<1x256xf32>
    %4 = arith.divf %2, %3 : vector<1x256xf32>
    %c0_5 = arith.constant 0 : index
    %c0_6 = arith.constant 0 : index
    %5 = vector.load %arg1[%c0_5, %c0_6] : memref<2x256xf32, #tpu.memory_space<vmem>>, vector<2x256xf32>
    %6 = vector.broadcast %4 : vector<1x256xf32> to vector<2x256xf32>
    %7 = arith.addf %5, %6 : vector<2x256xf32>
    %c0_7 = arith.constant 0 : index
    %c0_8 = arith.constant 0 : index
    %8 = vector.load %arg5[%c0_7, %c0_8] : memref<2x256xf32, #tpu.memory_space<vmem>>, vector<2x256xf32>
    tpu.vector_store %arg5[%c0_7, %c0_8], %7 {strides = array<i32>} : memref<2x256xf32, #tpu.memory_space<vmem>>, vector<2x256xf32>,
    return
  }
  func.func @transform_0(%arg0: i32) -> (i32, i32) {
    %c0_i32 = arith.constant 0 : i32
    %c0_i32_0 = arith.constant 0 : i32
    %c0_i32_1 = arith.constant 0 : i32
    return %c0_i32, %c0_i32_0 : i32, i32
  }
  func.func @transform_1(%arg0: i32) -> (i32, i32) {
    %c0_i32 = arith.constant 0 : i32
    %c0_i32_0 = arith.constant 0 : i32
    %c0_i32_1 = arith.constant 0 : i32
    return %c0_i32, %c0_i32_0 : i32, i32
  }
  func.func @transform_2(%arg0: i32) -> (i32, i32) {
    %c0_i32 = arith.constant 0 : i32
    %c0_i32_0 = arith.constant 0 : i32
    %c0_i32_1 = arith.constant 0 : i32
    return %c0_i32, %c0_i32_0 : i32, i32
  }
  func.func @transform_3(%arg0: i32) -> (i32, i32) {
    %c0_i32 = arith.constant 0 : i32
    %c0_i32_0 = arith.constant 0 : i32
    %c0_i32_1 = arith.constant 0 : i32
    return %c0_i32, %c0_i32_0 : i32, i32
  }
  func.func @transform_4(%arg0: i32) -> (i32, i32) {
    %c0_i32 = arith.constant 0 : i32
    %c0_i32_0 = arith.constant 0 : i32
    %c0_i32_1 = arith.constant 0 : i32
    return %c0_i32, %c0_i32_0 : i32, i32
  }
}

</mosaic_0001>

<llo_original>
// kernel: tpu_custom_call.1
$region0: #{tpu_custom_call.1}
  #allocation0 [shape = 'u32[]', space=smem, size = 0x4, offset = 0x4, fixed_abs, tag = 'smem constant byte address 0x4 - core index']
  #allocation1 [shape = 'u32[72,128]{1,0:T(1,128)}', space=vmem, size = 0x9000, scoped, tag = 'internal scratch']
  %s0 = inlined_call_operand.hbm [shape: f32[2,256], index: 0, kind: input, shape index: {}]
  %s1 = inlined_call_operand.hbm [shape: f32[1,256], index: 1, kind: input, shape index: {}]
  %s2 = inlined_call_operand.hbm [shape: f32[1,256], index: 2, kind: input, shape index: {}]
  %s3 = inlined_call_operand.vmem [shape: f32[1,256], index: 3, kind: input, shape index: {}]
  %s4 = inlined_call_operand.hbm [shape: f32[2,256], index: 4, kind: output, shape index: {}]
  %s5 = sld [smem:[#allocation0]]
  $region38: #{tpu_custom_call.1} parent=0
    _
  %s7 = ssub.s32 1, %s5
  %s8 = scalar_select 0, %s7, %s5
  $region1: #{tpu_custom_call.1} parent=0
    #allocation2 [shape = 'u8[2048]{0}', space=vmem, size = 0x800, scoped, tag = 'input window, operand 0, single buffered']
    #allocation3 [shape = 's32[1]{0}', space=sflag, size = 0x4, scoped, tag = 'scoped memory for tpu_custom_call.1']
    #allocation4 [shape = 's32[1]{0}', space=sflag, size = 0x4, scoped, tag = 'scoped memory for tpu_custom_call.1']
    #allocation5 [shape = 'u8[1024]{0}', space=vmem, size = 0x400, scoped, tag = 'input window, operand 1, single buffered']
    #allocation6 [shape = 's32[1]{0}', space=sflag, size = 0x4, scoped, tag = 'scoped memory for tpu_custom_call.1']
    #allocation7 [shape = 'u8[1024]{0}', space=vmem, size = 0x400, scoped, tag = 'input window, operand 2, single buffered']
    #allocation8 [shape = 'u8[2048]{0}', space=vmem, size = 0x800, scoped, tag = 'output window, operand 0, single buffered']
    %9 = vsyncpa [#allocation3], 0
    %10 = vsyncpa [#allocation6], 0
    %11 = vsyncpa [#allocation4], 0
    // Predicated region
    $region2: #{tpu_custom_call.1} parent=1 // pred_check
      _
    $region3: #{tpu_custom_call.1} parent=1 // pred_check_branch
      %13 = sbr.rel (0) target = $region5
    $region4: #{tpu_custom_call.1} parent=1 // pred_region
      %15 = vsyncadd [#allocation3], 0
      %s17 = sshll.u32 %s0, 4
      %s18 = int_to_ptr.hbm [resolvable:$true] %s17
      %s19 = sshll.u32 [#allocation2], 4
      %s20 = int_to_ptr.vmem [resolvable:$true] %s19
      %22 = dma.hbm_to_vmem [thread:$0]  %s18, 64, %s20, [#allocation3]
    $region5: #{tpu_custom_call.1} parent=1 // pred_fallthru
      _
    // Predicated region
    $region6: #{tpu_custom_call.1} parent=1 // pred_check
      _
    $region7: #{tpu_custom_call.1} parent=1 // pred_check_branch
      %24 = sbr.rel (0) target = $region9
    $region8: #{tpu_custom_call.1} parent=1 // pred_region
      %26 = vsyncadd [#allocation6], 0
      %s28 = sshll.u32 %s1, 4
      %s29 = int_to_ptr.hbm [resolvable:$true] %s28
      %s30 = sshll.u32 [#allocation5], 4
      %s31 = int_to_ptr.vmem [resolvable:$true] %s30
      %33 = dma.hbm_to_vmem [thread:$0]  %s29, 32, %s31, [#allocation6]
    $region9: #{tpu_custom_call.1} parent=1 // pred_fallthru
      _
    // Predicated region
    $region10: #{tpu_custom_call.1} parent=1 // pred_check
      _
    $region11: #{tpu_custom_call.1} parent=1 // pred_check_branch
      %35 = sbr.rel (0) target = $region13
    $region12: #{tpu_custom_call.1} parent=1 // pred_region
      %37 = vsyncadd [#allocation6], 0
      %s39 = sshll.u32 %s2, 4
      %s40 = int_to_ptr.hbm [resolvable:$true] %s39
      %s41 = sshll.u32 [#allocation7], 4
      %s42 = int_to_ptr.vmem [resolvable:$true] %s41
      %44 = dma.hbm_to_vmem [thread:$0]  %s40, 32, %s42, [#allocation6]
    $region13: #{tpu_custom_call.1} parent=1 // pred_fallthru
      _
    // Predicated region
    $region14: #{tpu_custom_call.1} parent=1 // pred_check
      _
    $region15: #{tpu_custom_call.1} parent=1 // pred_check_branch
      %46 = sbr.rel (0) target = $region17
    $region16: #{tpu_custom_call.1} parent=1 // pred_region
      _
    $region17: #{tpu_custom_call.1} parent=1 // pred_fallthru
      _
    // Predicated region
    $region18: #{tpu_custom_call.1} parent=1 // pred_check
      _
    $region19: #{tpu_custom_call.1} parent=1 // pred_check_branch
      %48 = sbr.rel (0) target = $region21
    $region20: #{tpu_custom_call.1} parent=1 // pred_region
      %50 = dma.done [#allocation3], 64
    $region21: #{tpu_custom_call.1} parent=1 // pred_fallthru
      _
    // Predicated region
    $region22: #{tpu_custom_call.1} parent=1 // pred_check
      _
    $region23: #{tpu_custom_call.1} parent=1 // pred_check_branch
      %52 = sbr.rel (0) target = $region25
    $region24: #{tpu_custom_call.1} parent=1 // pred_region
      %54 = dma.done [#allocation6], 32
    $region25: #{tpu_custom_call.1} parent=1 // pred_fallthru
      _
    // Predicated region
    $region26: #{tpu_custom_call.1} parent=1 // pred_check
      _
    $region27: #{tpu_custom_call.1} parent=1 // pred_check_branch
      %56 = sbr.rel (0) target = $region29
    $region28: #{tpu_custom_call.1} parent=1 // pred_region
      %58 = dma.done [#allocation6], 32
    $region29: #{tpu_custom_call.1} parent=1 // pred_fallthru
      _
    %v59 = vld [vmem:[#allocation5] sm:$0x3]
    %v60 = vld [vmem:[#allocation7] sm:$0x3]
    %v61 = vsub.f32 %v59, %v60
    %v62 = vld [vmem:[%s3] sm:$0x3]
    %v63 = vrcp.pop %v62
    %v64 = vmul.f32 %v62, %v63
    %v65 = vsub.f32 1.0, %v64
    %v66 = vmul.f32 %v63, %v65
    %v67 = vadd.f32 %v63, %v66
    %vm68 = vweird.f32 %v62
    %vm69 = vweird.f32 %v63
    %vm70 = vmor %vm68, %vm69
    %v71 = vsel %vm70, %v63, %v67
    %v72 = vand.u32 2147483647, %v62
    %vm73 = vcmp.eq.f32.partialorder %v72, 8.507059e+37
    %v74 = vand.u32 %v62, 2147483648
    %v75 = vor.u32 1.1754944e-38, %v74
    %v76 = vsel %vm73, %v75, %v71
    %v77 = vmul.f32 %v61, %v76
    %v78 = vld [vmem:[#allocation2] sm:$0xf]
    %v80 = vperm.slane %v77, 0
    %v81 = vperm.slane %v77, 1
    %v82 = vrot.slane %v81, 6
    %vm83 = vcmask 1041408
    %v84 = vsel %vm83, %v80, %v82
    %v86 = vadd.f32 %v78, %v84
    %87 = vst [vmem:[#allocation8] sm:$0xf] %v86
    // Predicated region
    $region30: #{tpu_custom_call.1} parent=1 // pred_check
      _
    $region31: #{tpu_custom_call.1} parent=1 // pred_check_branch
      %89 = sbr.rel (0) target = $region33
    $region32: #{tpu_custom_call.1} parent=1 // pred_region
      %91 = vsyncadd [#allocation4], 0
      %s93 = sshll.u32 [#allocation8], 4
      %s94 = int_to_ptr.vmem [resolvable:$true] %s93
      %s95 = sshll.u32 %s4, 4
      %s96 = int_to_ptr.hbm [resolvable:$true] %s95
      %98 = dma.vmem_to_hbm [thread:$0]  %s94, 64, %s96, [#allocation4]
    $region33: #{tpu_custom_call.1} parent=1 // pred_fallthru
      _
    // Predicated region
    $region34: #{tpu_custom_call.1} parent=1 // pred_check
      _
    $region35: #{tpu_custom_call.1} parent=1 // pred_check_branch
      %100 = sbr.rel (0) target = $region37
    $region36: #{tpu_custom_call.1} parent=1 // pred_region
      %102 = dma.done [#allocation4], 64
    $region37: #{tpu_custom_call.1} parent=1 // pred_fallthru
      _
    %103 = vsyncpa [#allocation3], 1
    %104 = vsyncpa [#allocation6], 1
    %105 = vsyncpa [#allocation4], 1

</llo_original>
